<compile_context>
chip_gen: v6e
topology: v6e:2x2x1
jax: 0.10.0
libtpu: 0.0.40
codegen_flags: <defaults>
</compile_context>

<pallas_src>
import functools

import jax
import jax.numpy as jnp
from jax.experimental import pallas as pl
from jax.experimental.pallas import tpu as pltpu

_LANE = 128


def _dtype_max(dtype) -> float:
    """Equivalent of torch_max_value(x.dtype) for floating dtypes."""
    return float(jnp.finfo(dtype).max)


def _hw_config():
    """TPU-generation-aware tiling/VMEM budget.

    Returns (target_block_bytes, vmem_cap_bytes, num_tensorcores).
    """
    kind = ""
    try:
        kind = jax.devices()[0].device_kind.lower()
    except Exception:  # pragma: no cover - non-TPU / query failure fallback
        pass
    if "7" in kind:
        # v7x: 64 MiB VMEM per TensorCore, 2 TCs per chip share the
        # "parallel" grid axis -> smaller blocks, conservative VMEM cap.
        return 2 << 20, 48 << 20, 2
    # v5e / v6e: 128 MiB VMEM, single TensorCore per chip -> bigger blocks,
    # no grid splitting for small/medium inputs.
    return 4 << 20, 96 << 20, 1


def _random_contrast_kernel(ratio_ref, x_ref, o_ref, *, bound, inv_n):
    # ratio_ref: (1, 1) f32 in SMEM
    # x_ref / o_ref: (N, ts*128) block in VMEM (lane-dense, full-N sublane dim)
    ratio = ratio_ref[0, 0]
    x = x_ref[...].astype(jnp.float32)

    # mean over dim 0 folded: (1 - ratio) * mean == c * sum, c = (1-ratio)/N.
    # The axis-0 sum is an elementwise VPU add over N dense slices (no
    # cross-lane reduce).
    c = (1.0 - ratio) * inv_n
    z = ratio * x + c * jnp.sum(x, axis=0, keepdims=True)

    # clamp(0, bound): -inf -> 0, +inf -> bound; NaN propagates (like torch).
    z = jnp.minimum(jnp.maximum(z, 0.0), bound)
    # nan_to_num(nan=0).  posinf/neginf branches are dead after the clamp.
    z = jnp.where(jnp.isnan(z), 0.0, z)

    o_ref[...] = z.astype(o_ref.dtype)


def _choose_tile_cols(n: int, ncols: int, itemsize: int,
                      target_block_bytes: int, num_tc: int) -> int:
    """Number of 128-lane columns per block.

    The block shape is (N, ts*128): the sublane dim is the full N extent, so
    ts has no divisibility constraint of its own.
    """
    bytes_per_col = n * _LANE * itemsize
    ts = max(1, target_block_bytes // bytes_per_col)
    ts = min(ts, ncols)
    if num_tc >= 2 and ncols >= 2:
        # v7x only: keep >= 2 grid steps so both TensorCores get work, and
        # prefer an even step count for balance (preference, not requirement).
        steps = pl.cdiv(ncols, ts)
        if steps < 2:
            steps = 2
        if steps % 2 == 1:
            steps += 1
        ts = pl.cdiv(ncols, steps)
    return max(1, ts)


def random_contrast(x, ratio):
    """Apply RandomContrast with a given (already-sampled) ratio scalar.

    x: (N, C, H, W) float array (NCHW, same as PyTorch).
    ratio: python float or 0-d array — the contrast ratio.
    """
    if not jnp.issubdtype(jnp.dtype(x.dtype), jnp.floating):
        # TODO(synk): integer image dtypes are not supported (torch.mean also
        # rejects integer tensors, so the PyTorch path is effectively
        # float-only as well).
        raise TypeError("random_contrast: only floating dtypes are supported")

    N, C, H, W = x.shape
    M = C * H * W
    bound = _dtype_max(x.dtype)
    itemsize = jnp.dtype(x.dtype).itemsize

    target_block_bytes, vmem_cap, num_tc = _hw_config()

    ncols = pl.cdiv(M, _LANE)                         # 128-lane columns
    ts = _choose_tile_cols(N, ncols, itemsize, target_block_bytes, num_tc)
    tb = ts * _LANE                                   # block width (elements)
    grid = (pl.cdiv(M, tb),)

    # No padding, no output slice: a contiguous reshape only (no HBM copy).
    x2d = x.reshape(N, M)

    ratio_arr = jnp.asarray(ratio, dtype=jnp.float32).reshape(1, 1)
    kernel = functools.partial(_random_contrast_kernel,
                               bound=bound, inv_n=1.0 / N)

    # VMEM budget from actual buffer math: 2 input + 2 output buffers in the
    # data dtype, plus in-kernel f32 temporaries, plus headroom.  Capped per
    # generation (48 MiB on v7x's 64 MiB VMEM, 96 MiB on v5e/v6e's 128 MiB).
    # TODO(synk): for extremely large N the ts=1 floor can still exceed the
    # cap; that case would need a grid axis over N with a precomputed mean.
    block_bytes = N * tb * itemsize
    f32_block = N * tb * 4
    required = 4 * block_bytes + 2 * f32_block + (4 << 20)
    vmem_limit = min(max(required, 32 << 20), vmem_cap)

    out2d = pl.pallas_call(
        kernel,
        out_shape=jax.ShapeDtypeStruct((N, M), x.dtype),
        grid_spec=pltpu.PrefetchScalarGridSpec(
            num_scalar_prefetch=0,
            grid=grid,
            in_specs=[
                pl.BlockSpec(memory_space=pltpu.MemorySpace.SMEM),  # ratio
                pl.BlockSpec((N, tb), lambda i: (0, i)),            # x block
            ],
            out_specs=pl.BlockSpec((N, tb), lambda i: (0, i)),
        ),
        compiler_params=pltpu.CompilerParams(
            dimension_semantics=("parallel",),
            vmem_limit_bytes=vmem_limit,
        ),
    )(ratio_arr, x2d)

    return out2d.reshape(N, C, H, W)


def random_contrast_ref(x, ratio):
    """Pure-JAX reference for correctness check."""
    bound = _dtype_max(x.dtype)
    xf = x.astype(jnp.float32)
    z = ratio * xf + (1.0 - ratio) * jnp.mean(xf, axis=0, keepdims=True)
    z = jnp.minimum(jnp.maximum(z, 0.0), bound)
    z = jnp.where(jnp.isnan(z), 0.0, z)
    return z.astype(x.dtype)


if __name__ == "__main__":
    key = jax.random.PRNGKey(0)
    kx, kr, kx2 = jax.random.split(key, 3)

    # Host-side sampled ratio in contrast_range=(0.5, 1.5), mirroring
    # float(torch.rand(1) * (hi - lo) + lo).
    # TODO(synk): RNG is sampled host-side (like torch.rand), not in-kernel.
    contrast_range = (0.5, 1.5)
    ratio = float(
        jax.random.uniform(kr, ())
        * (contrast_range[1] - contrast_range[0])
        + contrast_range[0]
    )

    # Small NCHW input: batch=2, channels=4, spatial=16x16 (M divisible by 128)
    N, C, H, W = 2, 4, 16, 16
    x = jax.random.normal(kx, (N, C, H, W), dtype=jnp.float32)

    out = jax.block_until_ready(random_contrast(x, ratio))
    ref = random_contrast_ref(x, ratio)
    assert out.shape == x.shape and out.dtype == x.dtype
    assert jnp.allclose(out, ref, atol=1e-5, rtol=1e-5)

    # Second shape exercising the masked partial final block
    # (C*H*W = 969, not a multiple of 128; no padding, no output slice).
    x2 = jax.random.normal(kx2, (2, 3, 17, 19), dtype=jnp.float32)
    out2 = jax.block_until_ready(random_contrast(x2, ratio))
    ref2 = random_contrast_ref(x2, ratio)
    assert out2.shape == x2.shape and out2.dtype == x2.dtype
    assert jnp.allclose(out2, ref2, atol=1e-5, rtol=1e-5)

    print("KERNEL_OK")
</pallas_src>

<mosaic_0001>
module attributes {stable_mosaic.version = 11 : i64} {
  func.func @_random_contrast_kernel(%arg0: i32, %arg1: memref<1x1xf32, #tpu.memory_space<smem>>, %arg2: memref<2x1024xf32, #tpu.memory_space<vmem>>, %arg3: memref<2x1024xf32, #tpu.memory_space<vmem>>) attributes {dimension_semantics = [#tpu.dimension_semantics<parallel>], iteration_bounds = array<i64: 1>, scalar_prefetch = 0 : i64, scratch_operands = 0 : i64, tpu.core_type = #tpu.core_type<tc>, window_params = [{transform_indices = @transform_0, window_bounds = array<i64: 1, 1>}, {transform_indices = @transform_1, window_bounds = array<i64: 2, 1024>}, {transform_indices = @transform_2, window_bounds = array<i64: 2, 1024>}]} {
    %c0 = arith.constant 0 : index
    %c0_0 = arith.constant 0 : index
    %0 = memref.load %arg1[%c0, %c0_0] : memref<1x1xf32, #tpu.memory_space<smem>>
    %c0_1 = arith.constant 0 : index
    %c0_2 = arith.constant 0 : index
    %1 = vector.load %arg2[%c0_1, %c0_2] : memref<2x1024xf32, #tpu.memory_space<vmem>>, vector<2x1024xf32>
    %cst = arith.constant 1.000000e+00 : f32
    %2 = arith.subf %cst, %0 : f32
    %cst_3 = arith.constant 5.000000e-01 : f32
    %3 = arith.mulf %2, %cst_3 : f32
    %4 = vector.broadcast %0 : f32 to vector<2x1024xf32>
    %5 = arith.mulf %4, %1 : vector<2x1024xf32>
    %cst_4 = arith.constant dense<0.000000e+00> : vector<1024xf32>
    %6 = vector.multi_reduction <add>, %1, %cst_4 [0] : vector<2x1024xf32> to vector<1024xf32>
    %7 = vector.shape_cast %6 : vector<1024xf32> to vector<1x1024xf32>
    %8 = vector.broadcast %3 : f32 to vector<1x1024xf32>
    %9 = arith.mulf %8, %7 : vector<1x1024xf32>
    %10 = vector.broadcast %9 : vector<1x1024xf32> to vector<2x1024xf32>
    %11 = arith.addf %5, %10 : vector<2x1024xf32>
    %cst_5 = arith.constant 0.000000e+00 : f32
    %12 = vector.broadcast %cst_5 : f32 to vector<2x1024xf32>
    %13 = arith.maximumf %11, %12 : vector<2x1024xf32>
    %cst_6 = arith.constant 3.40282347E+38 : f32
    %14 = vector.broadcast %cst_6 : f32 to vector<2x1024xf32>
    %15 = arith.minimumf %13, %14 : vector<2x1024xf32>
    %16 = arith.cmpf one, %15, %15 : vector<2x1024xf32>
    %cst_7 = arith.constant 0.000000e+00 : f32
    %17 = vector.broadcast %cst_7 : f32 to vector<2x1024xf32>
    %18 = arith.select %16, %17, %15 : vector<2x1024xi1>, vector<2x1024xf32>
    %c0_8 = arith.constant 0 : index
    %c0_9 = arith.constant 0 : index
    %19 = vector.load %arg3[%c0_8, %c0_9] : memref<2x1024xf32, #tpu.memory_space<vmem>>, vector<2x1024xf32>
    tpu.vector_store %arg3[%c0_8, %c0_9], %18 {strides = array<i32>} : memref<2x1024xf32, #tpu.memory_space<vmem>>, vector<2x1024xf32>,
    return
  }
  func.func @transform_0(%arg0: i32) -> (i32, i32) {
    %c0_i32 = arith.constant 0 : i32
    %c0_i32_0 = arith.constant 0 : i32
    %c0_i32_1 = arith.constant 0 : i32
    return %c0_i32, %c0_i32_0 : i32, i32
  }
  func.func @transform_1(%arg0: i32) -> (i32, i32) {
    %c0_i32 = arith.constant 0 : i32
    %c0_i32_0 = arith.constant 0 : i32
    return %c0_i32, %arg0 : i32, i32
  }
  func.func @transform_2(%arg0: i32) -> (i32, i32) {
    %c0_i32 = arith.constant 0 : i32
    %c0_i32_0 = arith.constant 0 : i32
    return %c0_i32, %arg0 : i32, i32
  }
}

</mosaic_0001>

<llo_original>
// kernel: tpu_custom_call.1
$region0: #{tpu_custom_call.1}
  #allocation0 [shape = 'u32[]', space=smem, size = 0x4, offset = 0x4, fixed_abs, tag = 'smem constant byte address 0x4 - core index']
  #allocation1 [shape = 'u32[144,128]{1,0:T(1,128)}', space=vmem, size = 0x12000, scoped, tag = 'internal scratch']
  #allocation2 [shape = 'f32[1,1]{1,0:T(1,128)S(6)}', space=smem, size = 0x200, scoped, tag = 'scoped memory for tpu_custom_call.1']
  %s0 = inlined_call_operand.<no memory space> [shape: f32[1,1], index: 0, kind: input, shape index: {}]
  %s1 = inlined_call_operand.hbm [shape: f32[2,1024], index: 1, kind: input, shape index: {}]
  %s2 = inlined_call_operand.hbm [shape: f32[2,1024], index: 2, kind: output, shape index: {}]
  %s3 = sld [smem:[#allocation0]]
  $region22: #{tpu_custom_call.1} parent=0
    _
  %s5 = ssub.s32 1, %s3
  %s6 = scalar_select 0, %s5, %s3
  %7 = sst [smem:[#allocation2]] %s0
  $region1: #{tpu_custom_call.1} parent=0
    #allocation3 [shape = 'u8[8192]{0}', space=vmem, size = 0x2000, scoped, tag = 'input window, operand 1, single buffered']
    #allocation4 [shape = 's32[1]{0}', space=sflag, size = 0x4, scoped, tag = 'scoped memory for tpu_custom_call.1']
    #allocation5 [shape = 's32[1]{0}', space=sflag, size = 0x4, scoped, tag = 'scoped memory for tpu_custom_call.1']
    #allocation6 [shape = 'u8[8192]{0}', space=vmem, size = 0x2000, scoped, tag = 'output window, operand 0, single buffered']
    %8 = vsyncpa [#allocation4], 0
    %9 = vsyncpa [#allocation5], 0
    // Predicated region
    $region2: #{tpu_custom_call.1} parent=1 // pred_check
      _
    $region3: #{tpu_custom_call.1} parent=1 // pred_check_branch
      %11 = sbr.rel (0) target = $region5
    $region4: #{tpu_custom_call.1} parent=1 // pred_region
      _
    $region5: #{tpu_custom_call.1} parent=1 // pred_fallthru
      _
    // Predicated region
    $region6: #{tpu_custom_call.1} parent=1 // pred_check
      _
    $region7: #{tpu_custom_call.1} parent=1 // pred_check_branch
      %13 = sbr.rel (0) target = $region9
    $region8: #{tpu_custom_call.1} parent=1 // pred_region
      %s15 = ssub.s32 256, 256
      %16 = vsyncadd [#allocation4], %s15
      %s18 = sshll.u32 [#allocation3], 4
      %s19 = int_to_ptr.vmem [resolvable:$true] %s18
      %21 = dma.hbm_to_vmem [thread:$0]  %s1, 256, %s19, [#allocation4]
    $region9: #{tpu_custom_call.1} parent=1 // pred_fallthru
      _
    // Predicated region
    $region10: #{tpu_custom_call.1} parent=1 // pred_check
      _
    $region11: #{tpu_custom_call.1} parent=1 // pred_check_branch
      %23 = sbr.rel (0) target = $region13
    $region12: #{tpu_custom_call.1} parent=1 // pred_region
      %24 = dma.done [#allocation4], 256
    $region13: #{tpu_custom_call.1} parent=1 // pred_fallthru
      _
    %s25 = sld [smem:[#allocation2]]
    %v26 = vld [vmem:[#allocation3] sm:$0xff]
    %v27 = vld [vmem:[#allocation3 + $0x8] sm:$0xff]
    %s28 = ssub.f32 1.0, %s25
    %s29 = smul.f32 %s28, 0.5
    %v30 = vstv %s25
    %v31 = vmul.f32 %v30, %v26
    %v32 = vmul.f32 %v30, %v27
    %v35 = vcombine.high %v26, %v26
    %v37 = vunpack.c.l.s4 1983009808
    %v38 = vunpack.c.0.s8 %v37
    %v39 = vlaneseq
    %v40 = vshrl.u32 %v39, 7
    %v41 = vsub.s32 %v38, %v40
    %v42 = vrot.slane %v26, %v41
    %v44 = vunpack.c.l.s4 1983009808
    %v45 = vunpack.c.0.s8 %v44
    %v46 = vlaneseq
    %v47 = vshrl.u32 %v46, 7
    %v48 = vsub.s32 %v45, %v47
    %v49 = vrot.slane %v35, %v48
    %v50 = vcombine.high %v42, %v42
    %v51 = vcombine.high %v49, %v49
    %v52 = vcombine.high %v27, %v27
    %v54 = vunpack.c.l.s4 1983009808
    %v55 = vunpack.c.0.s8 %v54
    %v56 = vlaneseq
    %v57 = vshrl.u32 %v56, 7
    %v58 = vsub.s32 %v55, %v57
    %v59 = vrot.slane %v27, %v58
    %v61 = vunpack.c.l.s4 1983009808
    %v62 = vunpack.c.0.s8 %v61
    %v63 = vlaneseq
    %v64 = vshrl.u32 %v63, 7
    %v65 = vsub.s32 %v62, %v64
    %v66 = vrot.slane %v52, %v65
    %v67 = vcombine.high %v59, %v59
    %v68 = vcombine.high %v66, %v66
    %vm77 = vcmask 1041408
    %v78 = vsel %vm77, %v42, 0.0
    %v79 = vrot.slane %v78, 4
    %v80 = vadd.f32 %v78, %v79
    %v81 = vrot.slane %v80, 2
    %v82 = vadd.f32 %v80, %v81
    %v83 = vrot.slane %v82, 1
    %v84 = vadd.f32 %v82, %v83
    %v85 = vsel %vm77, %v50, 0.0
    %v86 = vrot.slane %v85, 4
    %v87 = vadd.f32 %v85, %v86
    %v88 = vrot.slane %v87, 2
    %v89 = vadd.f32 %v87, %v88
    %v90 = vrot.slane %v89, 1
    %v91 = vadd.f32 %v89, %v90
    %v92 = vsel %vm77, %v49, 0.0
    %v93 = vrot.slane %v92, 4
    %v94 = vadd.f32 %v92, %v93
    %v95 = vrot.slane %v94, 2
    %v96 = vadd.f32 %v94, %v95
    %v97 = vrot.slane %v96, 1
    %v98 = vadd.f32 %v96, %v97
    %v99 = vsel %vm77, %v51, 0.0
    %v100 = vrot.slane %v99, 4
    %v101 = vadd.f32 %v99, %v100
    %v102 = vrot.slane %v101, 2
    %v103 = vadd.f32 %v101, %v102
    %v104 = vrot.slane %v103, 1
    %v105 = vadd.f32 %v103, %v104
    %v106 = vsel %vm77, %v59, 0.0
    %v107 = vrot.slane %v106, 4
    %v108 = vadd.f32 %v106, %v107
    %v109 = vrot.slane %v108, 2
    %v110 = vadd.f32 %v108, %v109
    %v111 = vrot.slane %v110, 1
    %v112 = vadd.f32 %v110, %v111
    %v113 = vsel %vm77, %v67, 0.0
    %v114 = vrot.slane %v113, 4
    %v115 = vadd.f32 %v113, %v114
    %v116 = vrot.slane %v115, 2
    %v117 = vadd.f32 %v115, %v116
    %v118 = vrot.slane %v117, 1
    %v119 = vadd.f32 %v117, %v118
    %v120 = vsel %vm77, %v66, 0.0
    %v121 = vrot.slane %v120, 4
    %v122 = vadd.f32 %v120, %v121
    %v123 = vrot.slane %v122, 2
    %v124 = vadd.f32 %v122, %v123
    %v125 = vrot.slane %v124, 1
    %v126 = vadd.f32 %v124, %v125
    %v127 = vsel %vm77, %v68, 0.0
    %v128 = vrot.slane %v127, 4
    %v129 = vadd.f32 %v127, %v128
    %v130 = vrot.slane %v129, 2
    %v131 = vadd.f32 %v129, %v130
    %v132 = vrot.slane %v131, 1
    %v133 = vadd.f32 %v131, %v132
    %v134 = vstv %s29
    %v135 = vmul.f32 %v134, %v84
    %v136 = vmul.f32 %v134, %v91
    %v137 = vmul.f32 %v134, %v98
    %v138 = vmul.f32 %v134, %v105
    %v139 = vmul.f32 %v134, %v112
    %v140 = vmul.f32 %v134, %v119
    %v141 = vmul.f32 %v134, %v126
    %v142 = vmul.f32 %v134, %v133
    %v151 = vcombine.low %v135, %v136
    %v152 = vcombine.low %v137, %v138
    %v154 = vunpack.c.l.s4 1983009808
    %v155 = vunpack.c.0.s8 %v154
    %v156 = vlaneseq
    %v157 = vshrl.u32 %v156, 7
    %v158 = vsub.s32 %v155, %v157
    %v159 = vrot.slane %v151, %v158
    %v161 = vunpack.c.l.s4 1983009808
    %v162 = vunpack.c.0.s8 %v161
    %v163 = vlaneseq
    %v164 = vshrl.u32 %v163, 7
    %v165 = vsub.s32 %v162, %v164
    %v166 = vrot.slane %v152, %v165
    %v167 = vcombine.low %v159, %v166
    %v168 = vcombine.low %v139, %v140
    %v169 = vcombine.low %v141, %v142
    %v171 = vunpack.c.l.s4 1983009808
    %v172 = vunpack.c.0.s8 %v171
    %v173 = vlaneseq
    %v174 = vshrl.u32 %v173, 7
    %v175 = vsub.s32 %v172, %v174
    %v176 = vrot.slane %v168, %v175
    %v178 = vunpack.c.l.s4 1983009808
    %v179 = vunpack.c.0.s8 %v178
    %v180 = vlaneseq
    %v181 = vshrl.u32 %v180, 7
    %v182 = vsub.s32 %v179, %v181
    %v183 = vrot.slane %v169, %v182
    %v184 = vcombine.low %v176, %v183
    %v187 = vadd.f32 %v31, %v167
    %v188 = vadd.f32 %v32, %v184
    %v189 = vmax.f32 %v187, 0.0
    %v190 = vmax.f32 %v188, 0.0
    %v191 = vmin.f32 %v189, 3.4028235e+38
    %v192 = vmin.f32 %v190, 3.4028235e+38
    %vm193 = vcmp.ne.f32.partialorder %v191, %v191
    %vm194 = vcmp.ne.f32.partialorder %v192, %v192
    %v195 = vsel %vm193, 0.0, %v191
    %v196 = vsel %vm194, 0.0, %v192
    %197 = vst [vmem:[#allocation6] sm:$0xff] %v195
    %198 = vst [vmem:[#allocation6 + $0x8] sm:$0xff] %v196
    // Predicated region
    $region14: #{tpu_custom_call.1} parent=1 // pred_check
      _
    $region15: #{tpu_custom_call.1} parent=1 // pred_check_branch
      %200 = sbr.rel (0) target = $region17
    $region16: #{tpu_custom_call.1} parent=1 // pred_region
      %s202 = ssub.s32 256, 256
      %203 = vsyncadd [#allocation5], %s202
      %s205 = sshll.u32 [#allocation6], 4
      %s206 = int_to_ptr.vmem [resolvable:$true] %s205
      %208 = dma.vmem_to_hbm [thread:$0]  %s206, 256, %s2, [#allocation5]
    $region17: #{tpu_custom_call.1} parent=1 // pred_fallthru
      _
    // Predicated region
    $region18: #{tpu_custom_call.1} parent=1 // pred_check
      _
    $region19: #{tpu_custom_call.1} parent=1 // pred_check_branch
      %210 = sbr.rel (0) target = $region21
    $region20: #{tpu_custom_call.1} parent=1 // pred_region
      %211 = dma.done [#allocation5], 256
    $region21: #{tpu_custom_call.1} parent=1 // pred_fallthru
      _
    %212 = vsyncpa [#allocation4], 1
    %213 = vsyncpa [#allocation5], 1

</llo_original>
